<compile_context>
chip_gen: v5e
topology: v5e:2x2
jax: 0.10.0
libtpu: 0.0.40
codegen_flags: <defaults>
</compile_context>

<pallas_src>
import functools

import jax
import jax.numpy as jnp
from jax.experimental import pallas as pl
from jax.experimental.pallas import tpu as pltpu


def _pick_tile_seq(seq, hidden, itemsize, target_bytes=2 << 20):
    """Largest multiple-of-8 divisor of seq with tile bytes <= target (~2 MiB)."""
    if seq % 8 != 0:
        return seq  # full-extent block is always layout-legal
    best = 8
    t = 8
    while t <= seq:
        if seq % t == 0 and t * hidden * itemsize <= target_bytes:
            best = t
        t += 8
    return best


def _mean_kernel(idx_ref, feats_ref, o_ref, acc_ref, *, inv_layers):
    """Accumulate one (tile_seq, hidden) layer slab; emit mean at last layer."""
    del idx_ref  # consumed only by the index_map
    layer = pl.program_id(1)

    @pl.when(layer == 0)
    def _():
        acc_ref[...] = jnp.zeros_like(acc_ref)

    x = feats_ref[...]                                  # (1, 1, tile_seq, hidden)
    acc_ref[...] += x[0, 0].astype(jnp.float32)

    @pl.when(layer == pl.num_programs(1) - 1)
    def _():
        o_ref[...] = (acc_ref[...] * inv_layers)[None].astype(o_ref.dtype)


def _select_kernel(idx_ref, feats_ref, o_ref):
    """Copy-cast one (tile_seq, hidden) slab of the statically chosen layer."""
    del idx_ref
    x = feats_ref[...]                                  # (1, 1, tile_seq, hidden)
    o_ref[...] = x[0].astype(o_ref.dtype)               # (1, tile_seq, hidden)


def wav2vec2_forward(feature_bank, index, layer_id):
    """Pallas implementation of Wav2Vec2.forward.

    Args:
      feature_bank: [num_items, num_layers, seq, hidden] (f32 or bf16)
      index: int32[1] -- which item to look up (runtime, scalar-prefetched)
      layer_id: Python int or the string 'all' (static, like the module attr)

    Returns:
      f32[1, seq, hidden]
    """
    num_items, num_layers, seq, hidden = feature_bank.shape
    itemsize = jnp.dtype(feature_bank.dtype).itemsize
    tile_seq = _pick_tile_seq(seq, hidden, itemsize)
    num_seq_tiles = seq // tile_seq
    out_shape = jax.ShapeDtypeStruct((1, seq, hidden), jnp.float32)

    if layer_id == "all":
        grid_spec = pltpu.PrefetchScalarGridSpec(
            num_scalar_prefetch=1,
            grid=(num_seq_tiles, num_layers),          # reduction (layer) axis last
            in_specs=[
                pl.BlockSpec(
                    (1, 1, tile_seq, hidden),
                    lambda s, l, idx: (idx[0], l, s, 0),
                ),
            ],
            # Same output block across the layer axis -> resident accumulator.
            out_specs=pl.BlockSpec((1, tile_seq, hidden),
                                   lambda s, l, idx: (0, s, 0)),
            scratch_shapes=[pltpu.VMEM((tile_seq, hidden), jnp.float32)],
        )
        return pl.pallas_call(
            functools.partial(_mean_kernel, inv_layers=1.0 / num_layers),
            out_shape=out_shape,
            grid_spec=grid_spec,
            compiler_params=pltpu.CompilerParams(
                dimension_semantics=("parallel", "arbitrary")
            ),
        )(index, feature_bank)

    elif (isinstance(layer_id, int) and not isinstance(layer_id, bool)
          and 0 <= layer_id < num_layers):
        grid_spec = pltpu.PrefetchScalarGridSpec(
            num_scalar_prefetch=1,
            grid=(num_seq_tiles,),
            in_specs=[
                pl.BlockSpec(
                    (1, 1, tile_seq, hidden),
                    lambda s, idx, _lid=layer_id: (idx[0], _lid, s, 0),
                ),
            ],
            out_specs=pl.BlockSpec((1, tile_seq, hidden),
                                   lambda s, idx: (0, s, 0)),
        )
        return pl.pallas_call(
            _select_kernel,
            out_shape=out_shape,
            grid_spec=grid_spec,
            compiler_params=pltpu.CompilerParams(
                dimension_semantics=("parallel",)
            ),
        )(index, feature_bank)

    else:
        raise ValueError("Invalid layer ID")


def _make_feature_bank(key, num_items, num_layers, seq, hidden, dtype=jnp.float32):
    # Deterministic synthetic stand-in for the np.load'ed feature_dict.
    return jax.random.normal(key, (num_items, num_layers, seq, hidden)).astype(dtype)


if __name__ == "__main__":
    num_items, num_layers, seq, hidden = 4, 6, 16, 128

    key = jax.random.PRNGKey(0)
    feature_bank = _make_feature_bank(key, num_items, num_layers, seq, hidden)
    index = jnp.array([2], dtype=jnp.int32)

    # --- layer_id = 'all' : mean over layers (tiled layer reduction) ---
    out_all = jax.block_until_ready(wav2vec2_forward(feature_bank, index, "all"))
    ref_all = jnp.mean(feature_bank[2].astype(jnp.float32), axis=0)[None]
    assert out_all.shape == (1, seq, hidden)
    assert out_all.dtype == jnp.float32
    assert jnp.allclose(out_all, ref_all, atol=1e-5, rtol=1e-5)

    # --- layer_id = int : single-layer select (tiled copy/cast) ---
    layer_id = 3
    out_one = jax.block_until_ready(wav2vec2_forward(feature_bank, index, layer_id))
    ref_one = feature_bank[2, layer_id].astype(jnp.float32)[None]
    assert out_one.shape == (1, seq, hidden)
    assert out_one.dtype == jnp.float32
    assert jnp.allclose(out_one, ref_one, atol=1e-6, rtol=1e-6)

    # --- bf16 bank (halves HBM traffic): f32 accumulation, f32 output ---
    bank_bf16 = feature_bank.astype(jnp.bfloat16)
    out_bf = jax.block_until_ready(wav2vec2_forward(bank_bf16, index, "all"))
    ref_bf = jnp.mean(bank_bf16[2].astype(jnp.float32), axis=0)[None]
    assert out_bf.dtype == jnp.float32
    assert jnp.allclose(out_bf, ref_bf, atol=1e-2, rtol=1e-2)

    out_bf1 = jax.block_until_ready(wav2vec2_forward(bank_bf16, index, layer_id))
    ref_bf1 = bank_bf16[2, layer_id].astype(jnp.float32)[None]
    assert out_bf1.dtype == jnp.float32
    assert jnp.allclose(out_bf1, ref_bf1, atol=1e-6, rtol=1e-6)

    print("KERNEL_OK")
</pallas_src>

<mosaic_0001>
module attributes {stable_mosaic.version = 11 : i64} {
  func.func @_mean_kernel(%arg0: i32, %arg1: i32, %arg2: memref<1xi32, #tpu.memory_space<smem>>, %arg3: memref<1x1x16x128xf32, #tpu.memory_space<vmem>>, %arg4: memref<1x16x128xf32, #tpu.memory_space<vmem>>, %arg5: memref<16x128xf32, #tpu.memory_space<vmem>>) attributes {dimension_semantics = [#tpu.dimension_semantics<parallel>, #tpu.dimension_semantics<arbitrary>], iteration_bounds = array<i64: 1, 6>, scalar_prefetch = 1 : i64, scratch_operands = 1 : i64, tpu.core_type = #tpu.core_type<tc>, window_params = [{transform_indices = @transform_0, window_bounds = array<i64: 1, 1, 16, 128>}, {transform_indices = @transform_1, window_bounds = array<i64: 1, 16, 128>}]} {
    %c0_i32 = arith.constant 0 : i32
    %0 = arith.cmpi eq, %arg1, %c0_i32 : i32
    %1 = arith.extui %0 : i1 to i32
    %c0_i32_0 = arith.constant 0 : i32
    %2 = arith.cmpi ne, %1, %c0_i32_0 : i32
    scf.if %2 {
      %cst = arith.constant 0.000000e+00 : f32
      %11 = vector.broadcast %cst : f32 to vector<16x128xf32>
      %c0_9 = arith.constant 0 : index
      %c0_10 = arith.constant 0 : index
      %12 = vector.load %arg5[%c0_9, %c0_10] : memref<16x128xf32, #tpu.memory_space<vmem>>, vector<16x128xf32>
      tpu.vector_store %arg5[%c0_9, %c0_10], %11 {strides = array<i32>} : memref<16x128xf32, #tpu.memory_space<vmem>>, vector<16x128xf32>,
    } else {
    }
    %c0 = arith.constant 0 : index
    %c0_1 = arith.constant 0 : index
    %c0_2 = arith.constant 0 : index
    %c0_3 = arith.constant 0 : index
    %3 = vector.load %arg3[%c0, %c0_1, %c0_2, %c0_3] : memref<1x1x16x128xf32, #tpu.memory_space<vmem>>, vector<1x1x16x128xf32>
    %c0_4 = arith.constant 0 : index
    %c0_5 = arith.constant 0 : index
    %4 = vector.load %arg5[%c0_4, %c0_5] : memref<16x128xf32, #tpu.memory_space<vmem>>, vector<16x128xf32>
    %5 = vector.shape_cast %3 : vector<1x1x16x128xf32> to vector<16x128xf32>
    %6 = arith.addf %4, %5 : vector<16x128xf32>
    %c0_6 = arith.constant 0 : index
    %c0_7 = arith.constant 0 : index
    %7 = vector.load %arg5[%c0_6, %c0_7] : memref<16x128xf32, #tpu.memory_space<vmem>>, vector<16x128xf32>
    tpu.vector_store %arg5[%c0_6, %c0_7], %6 {strides = array<i32>} : memref<16x128xf32, #tpu.memory_space<vmem>>, vector<16x128xf32>,
    %c5_i32 = arith.constant 5 : i32
    %8 = arith.cmpi eq, %arg1, %c5_i32 : i32
    %9 = arith.extui %8 : i1 to i32
    %c0_i32_8 = arith.constant 0 : i32
    %10 = arith.cmpi ne, %9, %c0_i32_8 : i32
    scf.if %10 {
      %c0_9 = arith.constant 0 : index
      %c0_10 = arith.constant 0 : index
      %11 = vector.load %arg5[%c0_9, %c0_10] : memref<16x128xf32, #tpu.memory_space<vmem>>, vector<16x128xf32>
      %cst = arith.constant 0.166666672 : f32
      %12 = vector.broadcast %cst : f32 to vector<16x128xf32>
      %13 = arith.mulf %11, %12 : vector<16x128xf32>
      %14 = vector.shape_cast %13 : vector<16x128xf32> to vector<1x16x128xf32>
      %c0_11 = arith.constant 0 : index
      %c0_12 = arith.constant 0 : index
      %c0_13 = arith.constant 0 : index
      %15 = vector.load %arg4[%c0_11, %c0_12, %c0_13] : memref<1x16x128xf32, #tpu.memory_space<vmem>>, vector<1x16x128xf32>
      tpu.vector_store %arg4[%c0_11, %c0_12, %c0_13], %14 {strides = array<i32>} : memref<1x16x128xf32, #tpu.memory_space<vmem>>, vector<1x16x128xf32>,
    } else {
    }
    return
  }
  func.func @transform_0(%arg0: i32, %arg1: i32, %arg2: memref<1xi32, #tpu.memory_space<smem>>) -> (i32, i32, i32, i32) {
    %c0 = arith.constant 0 : index
    %0 = memref.load %arg2[%c0] : memref<1xi32, #tpu.memory_space<smem>>
    %c0_i32 = arith.constant 0 : i32
    %c0_i32_0 = arith.constant 0 : i32
    return %0, %arg1, %arg0, %c0_i32 : i32, i32, i32, i32
  }
  func.func @transform_1(%arg0: i32, %arg1: i32, %arg2: memref<1xi32, #tpu.memory_space<smem>>) -> (i32, i32, i32) {
    %c0_i32 = arith.constant 0 : i32
    %c0_i32_0 = arith.constant 0 : i32
    %c0_i32_1 = arith.constant 0 : i32
    return %c0_i32, %arg0, %c0_i32_0 : i32, i32, i32
  }
}

</mosaic_0001>

<llo_original>
// kernel: tpu_custom_call.1
$region0: #{tpu_custom_call.1}
  #allocation0 [shape = 'u32[]', space=smem, size = 0x4, offset = 0x4, fixed_abs, tag = 'smem constant byte address 0x4 - core index']
  #allocation1 [shape = 'u32[72,128]{1,0:T(1,128)}', space=vmem, size = 0x9000, scoped, tag = 'internal scratch']
  #allocation2 [shape = 'f32[16,128]{1,0:T(8,128)}', space=vmem, size = 0x2000, scoped, tag = 'scratch operand']
  #allocation3 [shape = 's32[1]{0}', space=sflag, size = 0x4, scoped, tag = 'scoped memory for tpu_custom_call.1']
  #allocation4 [shape = 's32[1]{0:T(128)S(6)}', space=smem, size = 0x200, scoped, tag = 'prefetched SMEM operand 0']
  %s0 = inlined_call_operand.<no memory space> [shape: s32[1], index: 0, kind: input, shape index: {}]
  %s1 = inlined_call_operand.hbm [shape: f32[4,6,16,128], index: 1, kind: input, shape index: {}]
  %s2 = inlined_call_operand.hbm [shape: f32[1,16,128], index: 2, kind: output, shape index: {}]
  %s3 = sld [smem:[#allocation0]]
  $region49: #{tpu_custom_call.1} parent=0
    _
  %s5 = ssub.s32 1, %s3
  %s6 = scalar_select 0, %s5, %s3
  %7 = sst [smem:[#allocation4]] %s0
  $region1: #{tpu_custom_call.1} parent=0
    #allocation5 [shape = 'u8[16384]{0}', space=vmem, size = 0x4000, scoped, tag = 'input window, operand 1']
    #allocation6 [shape = 's32[2]{0}', space=sflag, size = 0x8, scoped, tag = 'scoped memory for tpu_custom_call.1']
    #allocation7 [shape = 's32[2]{0}', space=sflag, size = 0x8, scoped, tag = 'scoped memory for tpu_custom_call.1']
    #allocation8 [shape = 'u8[8192]{0}', space=vmem, size = 0x2000, scoped, tag = 'output window, operand 0, single buffered']
    %8 = vsyncpa [#allocation6], 0
    %s9 = scalar_lea.sflag [#allocation6], 1
    %10 = vsyncpa %s9, 0
    %11 = vsyncpa [#allocation7], 0
    loop: start=0, step=1, limit=8
    $region2: #{tpu_custom_call.1} parent=1 // loop_pre_header
      _
    $region3: #{tpu_custom_call.1} parent=1 // loop_header
      %s13 = sphi 0, %s17
      %p14 = scmp.ge.s32.totalorder %s13, 8
      %s20 = sphi 0, %s32
      %s21 = sphi 0, %s28
      %s22 = sphi 0, %s20
      %s23 = sphi 0, %s21
      %s24 = sphi 0, %s22
      %s25 = sphi 0, %s23
      %s41 = sphi 0, %s43
      %s44 = sphi 0, %s41
      %s45 = sphi 0, %s44
      %s61 = sphi 0, %s45
      %s67 = sphi 0, %s69
      %s70 = sphi 0, %s67
      %s71 = sphi 0, %s70
      %s87 = sphi 0, %s71
    $region4: #{tpu_custom_call.1} parent=1 // loop_header_branch
      %16 = sbr.rel (%p14) target = $region8
    $region5: #{tpu_custom_call.1} parent=1 // loop_body
      %s18 = ssub.s32 %s13, 1
      %s19 = ssub.s32 %s13, 2
      %s26 = sadd.s32 1, %s21
      %p27 = scmp.ge.s32.totalorder %s26, 6
      %s28 = scalar_select %p27, 0, %s26
      %s29 = sadd.s32 1, %s20
      %s30 = scalar_select %p27, %s29, %s20
      %p31 = scmp.ge.s32.totalorder %s30, 1
      %s32 = scalar_select %p31, 0, %s30
      %s33 = sld [smem:[#allocation4]]
      %s34 = sld [smem:[#allocation4]]
      %s35 = ssub.s32 %s33, %s34
      %s36 = ssub.s32 %s21, %s28
      %s37 = sor.u32 %s35, %s36
      %s38 = ssub.s32 %s20, %s32
      %s39 = sor.u32 %s37, %s38
      %p40 = scmp.eq.s32.totalorder %s39, 0
      %s42 = sadd.s32 %s41, 1
      %s43 = scalar_select %p40, %s41, %s42
      %p46 = pneg %p40
      %p47 = scmp.eq.s32.totalorder %s13, 5
      %p48 = por %p46, %p47
      %p49 = scmp.ne.s32.totalorder %s41, %s44
      %p50 = scmp.eq.s32.totalorder %s13, 0
      %p51 = por %p49, %p50
      %p52 = scmp.ne.s32.totalorder %s41, %s44
      %p53 = scmp.eq.s32.totalorder %s18, 5
      %p54 = por %p52, %p53
      %p55 = scmp.ne.s32.totalorder %s44, %s45
      %p56 = scmp.eq.s32.totalorder %s18, 0
      %p57 = por %p55, %p56
      %p58 = scmp.ne.s32.totalorder %s44, %s45
      %p59 = scmp.eq.s32.totalorder %s19, 5
      %p60 = por %p58, %p59
      %p62 = scmp.ne.s32.totalorder %s45, %s61
      %p63 = scmp.eq.s32.totalorder %s19, 0
      %p64 = por %p62, %p63
      %s65 = ssub.s32 %s20, %s32
      %p66 = scmp.eq.s32.totalorder %s65, 0
      %s68 = sadd.s32 %s67, 1
      %s69 = scalar_select %p66, %s67, %s68
      %p72 = pneg %p66
      %p73 = scmp.eq.s32.totalorder %s13, 5
      %p74 = por %p72, %p73
      %p75 = scmp.ne.s32.totalorder %s67, %s70
      %p76 = scmp.eq.s32.totalorder %s13, 0
      %p77 = por %p75, %p76
      %p78 = scmp.ne.s32.totalorder %s67, %s70
      %p79 = scmp.eq.s32.totalorder %s18, 5
      %p80 = por %p78, %p79
      %p81 = scmp.ne.s32.totalorder %s70, %s71
      %p82 = scmp.eq.s32.totalorder %s18, 0
      %p83 = por %p81, %p82
      %p84 = scmp.ne.s32.totalorder %s70, %s71
      %p85 = scmp.eq.s32.totalorder %s19, 5
      %p86 = por %p84, %p85
      %p88 = scmp.ne.s32.totalorder %s71, %s87
      %p89 = scmp.eq.s32.totalorder %s19, 0
      %p90 = por %p88, %p89
      %p91 = scmp.le.s32.totalorder 1, %s13
      %p92 = scmp.lt.s32.totalorder %s13, 7
      %p93 = pnand %p91, %p92
      %p94 = pneg %p93
      // Predicated region
      $region9: #{tpu_custom_call.1} parent=5 // pred_check
        _
      $region10: #{tpu_custom_call.1} parent=5 // pred_check_branch
        %96 = sbr.rel (%p93) target = $region12
      $region11: #{tpu_custom_call.1} parent=5 // pred_region
        %s97 = ssub.s32 %s13, 1
      $region12: #{tpu_custom_call.1} parent=5 // pred_fallthru
        _
      %p98 = scmp.lt.s32.totalorder %s13, 6
      // Predicated region
      $region13: #{tpu_custom_call.1} parent=5 // pred_check
        %p99 = pneg %p98
      $region14: #{tpu_custom_call.1} parent=5 // pred_check_branch
        %101 = sbr.rel (%p99) target = $region16
      $region15: #{tpu_custom_call.1} parent=5 // pred_region
        // Predicated region
        $region17: #{tpu_custom_call.1} parent=15 // pred_check
          %p102 = pneg %p51
        $region18: #{tpu_custom_call.1} parent=15 // pred_check_branch
          %104 = sbr.rel (%p102) target = $region20
        $region19: #{tpu_custom_call.1} parent=15 // pred_region
          %s105 = sand.u32 %s41, 1
          %s106 = scalar_lea.sflag [#allocation6], %s105
          %s107 = sand.u32 %s41, 1
          %s108 = smul.addr %s107, 16
          %s109 = scalar_lea.vmem [#allocation5], %s108
          %s110 = sld [smem:[#allocation4]]
          %s111 = smul.u32 2, %s20
          %113 = vsyncadd %s106, 0
          %s114 = smul.addr %s21, 2
          %s115 = sadd.s32 %s111, %s114
          %s116 = smul.addr %s110, 12
          %s117 = sadd.s32 %s115, %s116
          %s118 = smul.addr %s117, 8
          %s119 = scalar_lea.hbm %s1, %s118
          %s120 = sshll.u32 %s119, 4
          %s121 = int_to_ptr.hbm [resolvable:$true] %s120
          %s122 = sshll.u32 %s109, 4
          %s123 = int_to_ptr.vmem [resolvable:$true] %s122
          %128 = dma.hbm_to_vmem [thread:$0]  %s121, 256, %s123, %s106, 128, 128, 8
        $region20: #{tpu_custom_call.1} parent=15 // pred_fallthru
          _
      $region16: #{tpu_custom_call.1} parent=5 // pred_fallthru
        _
      %p129 = scmp.le.s32.totalorder 1, %s13
      %p130 = scmp.lt.s32.totalorder %s13, 7
      %p131 = pnand %p129, %p130
      %p132 = pneg %p131
      // Predicated region
      $region21: #{tpu_custom_call.1} parent=5 // pred_check
        _
      $region22: #{tpu_custom_call.1} parent=5 // pred_check_branch
        %134 = sbr.rel (%p131) target = $region24
      $region23: #{tpu_custom_call.1} parent=5 // pred_region
        %s135 = ssub.s32 %s13, 1
        %s136 = sand.u32 %s44, 1
        %s137 = scalar_lea.sflag [#allocation6], %s136
        %s138 = sand.u32 %s44, 1
        %s139 = smul.addr %s138, 16
        %s140 = scalar_lea.vmem [#allocation5], %s139
        // Predicated region
        $region25: #{tpu_custom_call.1} parent=23 // pred_check
          %p141 = pneg %p57
        $region26: #{tpu_custom_call.1} parent=23 // pred_check_branch
          %143 = sbr.rel (%p141) target = $region28
        $region27: #{tpu_custom_call.1} parent=23 // pred_region
          %145 = dma.done %s137, 256
        $region28: #{tpu_custom_call.1} parent=23 // pred_fallthru
          _
        %s146 = sand.u32 %s44, 1
        %s147 = scalar_lea.sflag [#allocation6], %s146
        %s148 = sand.u32 %s44, 1
        %s149 = smul.addr %s148, 16
        %s150 = scalar_lea.vmem [#allocation5], %s149
        %p151 = pneg %p57
        %p152 = pneg %p54
        %p153 = pneg %p83
        %p154 = pneg %p80
        %s155 = sld [smem:[#allocation4]]
        %s156 = smul.u32 2, %s22
        %s157 = smul.u32 2, %s22
        %p158 = scmp.eq.s32.totalorder %s23, 0
        // Predicated region
        $region29: #{tpu_custom_call.1} parent=23 // pred_check
          %p159 = pneg %p158
        $region30: #{tpu_custom_call.1} parent=23 // pred_check_branch
          %161 = sbr.rel (%p159) target = $region32
        $region31: #{tpu_custom_call.1} parent=23 // pred_region
          %162 = vst [vmem:[#allocation2] sm:$0xff] 0.0
          %163 = vst [vmem:[#allocation2 + $0x8] sm:$0xff] 0.0
        $region32: #{tpu_custom_call.1} parent=23 // pred_fallthru
          _
        %v164 = vld [vmem:[%s140] sm:$0xff]
        %v165 = vld [vmem:[%s140 + $0x8] sm:$0xff]
        %v166 = vld [vmem:[#allocation2] sm:$0xff]
        %v167 = vld [vmem:[#allocation2 + $0x8] sm:$0xff]
        %v168 = vadd.f32 %v166, %v164
        %v169 = vadd.f32 %v167, %v165
        %170 = vst [vmem:[#allocation2] sm:$0xff] %v168
        %171 = vst [vmem:[#allocation2 + $0x8] sm:$0xff] %v169
        %p172 = scmp.eq.s32.totalorder %s23, 5
        // Predicated region
        $region33: #{tpu_custom_call.1} parent=23 // pred_check
          %p173 = pneg %p172
        $region34: #{tpu_custom_call.1} parent=23 // pred_check_branch
          %175 = sbr.rel (%p173) target = $region36
        $region35: #{tpu_custom_call.1} parent=23 // pred_region
          %v176 = vld [vmem:[#allocation2] sm:$0xff]
          %v177 = vld [vmem:[#allocation2 + $0x8] sm:$0xff]
          %v178 = vmul.f32 %v176, 0.16666667
          %v179 = vmul.f32 %v177, 0.16666667
          %180 = vst [vmem:[#allocation8] sm:$0xff] %v178
          %181 = vst [vmem:[#allocation8 + $0x8] sm:$0xff] %v179
        $region36: #{tpu_custom_call.1} parent=23 // pred_fallthru
          _
        // Predicated region
        $region37: #{tpu_custom_call.1} parent=23 // pred_check
          %p182 = pneg %p80
        $region38: #{tpu_custom_call.1} parent=23 // pred_check_branch
          %184 = sbr.rel (%p182) target = $region40
        $region39: #{tpu_custom_call.1} parent=23 // pred_region
          %s185 = smul.u32 2, %s22
          %187 = vsyncadd [#allocation7], 0
          %s188 = smul.addr %s185, 8
          %s189 = scalar_lea.hbm %s2, %s188
          %s190 = sshll.u32 [#allocation8], 4
          %s191 = int_to_ptr.vmem [resolvable:$true] %s190
          %s192 = sshll.u32 %s189, 4
          %s193 = int_to_ptr.hbm [resolvable:$true] %s192
          %198 = dma.vmem_to_hbm [thread:$0]  %s191, 256, %s193, [#allocation7], 128, 128, 8
        $region40: #{tpu_custom_call.1} parent=23 // pred_fallthru
          _
        // Predicated region
        $region41: #{tpu_custom_call.1} parent=23 // pred_check
          %p199 = pneg %p80
        $region42: #{tpu_custom_call.1} parent=23 // pred_check_branch
          %201 = sbr.rel (%p199) target = $region44
        $region43: #{tpu_custom_call.1} parent=23 // pred_region
          %203 = dma.done [#allocation7], 256
        $region44: #{tpu_custom_call.1} parent=23 // pred_fallthru
          _
      $region24: #{tpu_custom_call.1} parent=5 // pred_fallthru
        _
      %p204 = scmp.le.s32.totalorder 2, %s13
      // Predicated region
      $region45: #{tpu_custom_call.1} parent=5 // pred_check
        %p205 = pneg %p204
      $region46: #{tpu_custom_call.1} parent=5 // pred_check_branch
        %207 = sbr.rel (%p205) target = $region48
      $region47: #{tpu_custom_call.1} parent=5 // pred_region
        %s208 = ssub.s32 %s13, 2
      $region48: #{tpu_custom_call.1} parent=5 // pred_fallthru
        _
    $region6: #{tpu_custom_call.1} parent=1 // loop_footer
      %s17 = sadd.s32 1, %s13
    $region7: #{tpu_custom_call.1} parent=1 // loop_footer_branch
      %12 = sbr.rel target = $region3
    $region8: #{tpu_custom_call.1} parent=1 // loop_exit
      _
    %209 = vsyncpa [#allocation6], 1
    %s210 = scalar_lea.sflag [#allocation6], 1
    %211 = vsyncpa %s210, 1
    %212 = vsyncpa [#allocation7], 1
    %s213 = scalar_lea.sflag [#allocation7], 1
    %214 = vsyncpa %s213, 1

</llo_original>
